<compile_context>
chip_gen: v6e
topology: v6e:2x2x1
jax: 0.10.0
libtpu: 0.0.40
codegen_flags: <defaults>
</compile_context>

<pallas_src>
import functools

import jax
import jax.numpy as jnp
from jax import lax
from jax.experimental import pallas as pl
from jax.experimental.pallas import tpu as pltpu


# ----------------------------------------------------------------------------
# Small sorting helpers (pure VPU min/max work).
# ----------------------------------------------------------------------------
def _sort3(a, b, c):
    lo1, hi1 = jnp.minimum(a, b), jnp.maximum(a, b)
    lo, t = jnp.minimum(lo1, c), jnp.maximum(lo1, c)
    mid, hi = jnp.minimum(t, hi1), jnp.maximum(t, hi1)
    return lo, mid, hi


def _med3(a, b, c):
    return jnp.maximum(jnp.minimum(a, b), jnp.minimum(jnp.maximum(a, b), c))


def _batcher_sort_pairs(n):
    """Batcher odd-even mergesort comparator list for n inputs.

    Generated for the next power of two with conceptual +inf padding at the
    top indices; comparators that only touch padded slots are no-ops and are
    dropped.  Every comparator (a, b) has a < b and places min at a.
    """
    p = 1
    while p < n:
        p *= 2
    pairs = []

    def merge(lo, hi, r):
        step = r * 2
        if step < hi - lo:
            merge(lo, hi, step)
            merge(lo + r, hi, step)
            for i in range(lo + r, hi - r, step):
                pairs.append((i, i + r))
        else:
            pairs.append((lo, lo + r))

    def sort(lo, hi):
        if hi - lo >= 1:
            mid = lo + (hi - lo) // 2
            sort(lo, mid)
            sort(mid + 1, hi)
            merge(lo, hi, 1)

    if p > 1:
        sort(0, p - 1)
    return [(a, b) for (a, b) in pairs if b < n]


# ----------------------------------------------------------------------------
# Pallas kernels.  Input block: (bt, Ho + kh - 1, Wb); output: (bt, Ho, Wb).
# Horizontal shifts are cyclic lane rolls; wrapped columns only ever land in
# output columns that the wrapper crops away.
# ----------------------------------------------------------------------------
def _median3x3_kernel(x_ref, o_ref):
    ho = o_ref.shape[1]
    wb = x_ref.shape[2]

    # Three sublane-offset ref slices (no materialized shifted copies).
    r0 = x_ref[:, pl.ds(0, ho), :]
    r1 = x_ref[:, pl.ds(1, ho), :]
    r2 = x_ref[:, pl.ds(2, ho), :]

    # Column sort, shared by the 3 horizontal taps.
    lo, mid, hi = _sort3(r0, r1, r2)

    def shift(a, d):
        # result[..., j] = a[..., (j + d) % wb]  (XLU lane rotate)
        return pltpu.roll(a, shift=wb - d, axis=2)

    lo1, lo2 = shift(lo, 1), shift(lo, 2)
    mid1, mid2 = shift(mid, 1), shift(mid, 2)
    hi1, hi2 = shift(hi, 1), shift(hi, 2)

    max_lo = jnp.maximum(jnp.maximum(lo, lo1), lo2)
    min_hi = jnp.minimum(jnp.minimum(hi, hi1), hi2)
    med_mid = _med3(mid, mid1, mid2)

    o_ref[...] = _med3(max_lo, med_mid, min_hi).astype(o_ref.dtype)


def _median_generic_kernel(x_ref, o_ref, *, kh, kw, pairs, med_idx):
    ho = o_ref.shape[1]
    wb = x_ref.shape[2]

    rows = [x_ref[:, pl.ds(di, ho), :] for di in range(kh)]
    vals = []
    for dj in range(kw):
        for r in rows:
            vals.append(r if dj == 0 else pltpu.roll(r, shift=wb - dj, axis=2))

    p = list(vals)
    for a, b in pairs:
        pa, pb = p[a], p[b]
        p[a], p[b] = jnp.minimum(pa, pb), jnp.maximum(pa, pb)
    o_ref[...] = p[med_idx].astype(o_ref.dtype)


# ----------------------------------------------------------------------------
# Wrapper matching MedianPool2d.forward
# ----------------------------------------------------------------------------
def _pair(v):
    return (v, v) if isinstance(v, int) else tuple(v)


def _quadruple(v):
    return (v, v, v, v) if isinstance(v, int) else tuple(v)


def median_pool2d(x, kernel_size=3, stride=1, padding=0, same=False,
                  block_bytes=None):
    """Matches MedianPool2d.forward for NCHW input."""
    k = _pair(kernel_size)
    st = _pair(stride)
    pad4 = _quadruple(padding)
    kh, kw = int(k[0]), int(k[1])
    sh, sw = int(st[0]), int(st[1])
    N, C, H, W = x.shape

    # Padding selection (identical to the module's _padding).
    if same:
        ph = max(kh - sh, 0) if H % sh == 0 else max(kh - H % sh, 0)
        pw = max(kw - sw, 0) if W % sw == 0 else max(kw - W % sw, 0)
        p_l, p_r = pw // 2, pw - pw // 2
        p_t, p_b = ph // 2, ph - ph // 2
    else:
        p_l, p_r, p_t, p_b = pad4

    if max(p_t, p_b) >= H or max(p_l, p_r) >= W:
        raise ValueError("reflect padding must be smaller than the spatial dims")

    xp = jnp.pad(x, ((0, 0), (0, 0), (p_t, p_b), (p_l, p_r)), mode="reflect")
    Hp, Wp = H + p_t + p_b, W + p_l + p_r
    Hd, Wd = Hp - kh + 1, Wp - kw + 1  # dense (stride-1) output size
    if Hd < 1 or Wd < 1:
        raise ValueError("kernel is larger than the padded input")

    NC = N * C
    dtype = x.dtype
    isz = jnp.dtype(dtype).itemsize
    n_win = kh * kw

    # --- band packing: make the lane (last) axis >= 128 and 128-aligned -----
    G = max(1, min(128 // Wp, NC))
    NC_pad = pl.cdiv(NC, G) * G
    xf = xp.reshape(NC, Hp, Wp)
    if NC_pad != NC:
        xf = jnp.pad(xf, ((0, NC_pad - NC), (0, 0), (0, 0)))
    NCb = NC_pad // G
    xb = xf.reshape(NCb, G, Hp, Wp).transpose(0, 2, 1, 3).reshape(NCb, Hp, G * Wp)
    Wband = G * Wp
    Wb = pl.cdiv(Wband, 128) * 128
    if Wb != Wband:
        xb = jnp.pad(xb, ((0, 0), (0, 0), (0, Wb - Wband)))

    # --- block-size targets (chip-aware) -------------------------------------
    live = 12 if (kh == 3 and kw == 3) else n_win + 8  # live block-sized temps
    try:
        vmem_cap = int(pltpu.get_tpu_info().vmem_capacity_bytes)
    except Exception:
        vmem_cap = 64 << 20  # conservative (v7x per-core)
    big_vmem = vmem_cap > (96 << 20)          # v5e/v6e: 128 MiB; v7x: 64 MiB
    temp_budget = (48 << 20) if big_vmem else (24 << 20)
    base_tgt = (3 << 20) if big_vmem else (3 << 19)
    if block_bytes is not None:
        blk_target = max(1024, int(block_bytes))
    else:
        blk_target = max(256 << 10, min(base_tgt, temp_budget // (live + 4)))

    # --- H tiling with kh-1 halo rows for large planes -----------------------
    plane_bytes = Hp * Wb * isz
    if plane_bytes <= blk_target:
        ht, hin_t, nh = Hd, Hp, 1
        xt = xb[:, None]                                    # (NCb, 1, Hp, Wb)
    else:
        ht = max(8, (blk_target // (Wb * isz)) - (kh - 1))
        ht = min(ht, Hd)
        nh = pl.cdiv(Hd, ht)
        hin_t = ht + kh - 1
        rows_needed = nh * ht + kh - 1
        if rows_needed > Hp:
            xb = jnp.pad(xb, ((0, 0), (0, rows_needed - Hp), (0, 0)))
        xt = jnp.stack([xb[:, t * ht:t * ht + hin_t, :] for t in range(nh)],
                       axis=1)                              # (NCb, nh, hin_t, Wb)
    xt = xt.reshape(NCb * nh, hin_t, Wb)
    NT = NCb * nh

    # --- bands/tiles per grid step; keep the grid even for v7x's 2 TCs -------
    tile_bytes = hin_t * Wb * isz
    bt = max(1, min(NT, blk_target // max(tile_bytes, 1)))
    nb = pl.cdiv(NT, bt)
    if NT >= 2 and nb % 2 == 1:
        for cand in range(bt, max(1, bt // 2) - 1, -1):
            if pl.cdiv(NT, cand) % 2 == 0:
                bt = cand
                nb = pl.cdiv(NT, cand)
                break
    NT_pad = nb * bt
    if NT_pad != NT:
        xt = jnp.pad(xt, ((0, NT_pad - NT), (0, 0), (0, 0)))

    # --- explicit VMEM sizing -------------------------------------------------
    in_blk = bt * hin_t * Wb * isz
    out_blk = bt * ht * Wb * isz
    vmem_needed = 2 * (in_blk + out_blk) + live * max(in_blk, out_blk)
    vmem_cap_req = (64 << 20) if big_vmem else (32 << 20)
    vmem_limit = int(min(vmem_cap_req, max(16 << 20, vmem_needed + (6 << 20))))
    vmem_limit = max(vmem_limit, vmem_needed + (2 << 20))

    # --- kernel selection + cost hint -----------------------------------------
    if kh == 3 and kw == 3:
        kernel = _median3x3_kernel
        ops_pp = 18
    else:
        pairs = tuple(_batcher_sort_pairs(n_win))
        kernel = functools.partial(_median_generic_kernel, kh=kh, kw=kw,
                                   pairs=pairs, med_idx=(n_win - 1) // 2)
        ops_pp = 2 * len(pairs) + n_win
    cost = pl.CostEstimate(
        flops=int(ops_pp) * NT_pad * ht * Wb,
        transcendentals=0,
        bytes_accessed=int((NT_pad * hin_t + NT_pad * ht) * Wb * isz),
    )

    out_t = pl.pallas_call(
        kernel,
        out_shape=jax.ShapeDtypeStruct((NT_pad, ht, Wb), dtype),
        grid_spec=pltpu.PrefetchScalarGridSpec(
            num_scalar_prefetch=0,
            grid=(nb,),
            in_specs=[pl.BlockSpec((bt, hin_t, Wb), lambda i: (i, 0, 0))],
            out_specs=pl.BlockSpec((bt, ht, Wb), lambda i: (i, 0, 0)),
        ),
        compiler_params=pltpu.CompilerParams(
            dimension_semantics=("parallel",),
            vmem_limit_bytes=vmem_limit,
        ),
        cost_estimate=cost,
    )(xt)

    # --- unpack: row tiles, bands, planes, then stride ------------------------
    o = out_t[:NT].reshape(NCb, nh * ht, Wb)[:, :Hd, :Wband]
    o = o.reshape(NCb, Hd, G, Wp)[:, :, :, :Wd]
    o = o.transpose(0, 2, 1, 3).reshape(NC_pad, Hd, Wd)[:NC]
    out = o.reshape(N, C, Hd, Wd)
    if sh != 1 or sw != 1:
        out = out[:, :, ::sh, ::sw]
    return out


# ----------------------------------------------------------------------------
# Pure-JAX reference (sort-based) mirroring the torch module.
# ----------------------------------------------------------------------------
def _median_pool2d_ref(x, kernel_size=3, stride=1, padding=0, same=False):
    k = _pair(kernel_size)
    st = _pair(stride)
    pad4 = _quadruple(padding)
    N, C, H, W = x.shape
    if same:
        ph = max(k[0] - st[0], 0) if H % st[0] == 0 else max(k[0] - H % st[0], 0)
        pw = max(k[1] - st[1], 0) if W % st[1] == 0 else max(k[1] - W % st[1], 0)
        p_l, p_r = pw // 2, pw - pw // 2
        p_t, p_b = ph // 2, ph - ph // 2
    else:
        p_l, p_r, p_t, p_b = pad4
    xp = jnp.pad(x, ((0, 0), (0, 0), (p_t, p_b), (p_l, p_r)), mode="reflect")
    Hp, Wp = xp.shape[2], xp.shape[3]
    h_out = (Hp - k[0]) // st[0] + 1
    w_out = (Wp - k[1]) // st[1] + 1
    wins = []
    for di in range(k[0]):
        for dj in range(k[1]):
            wins.append(
                lax.slice(
                    xp,
                    (0, 0, di, dj),
                    (N, C, di + (h_out - 1) * st[0] + 1, dj + (w_out - 1) * st[1] + 1),
                    (1, 1, st[0], st[1]),
                )
            )
    v = jnp.stack(wins, axis=-1)
    v = jnp.sort(v, axis=-1)
    m = (k[0] * k[1] - 1) // 2
    return v[..., m]


if __name__ == "__main__":
    # Default module config (3x3 median filter, same padding).
    key = jax.random.PRNGKey(0)
    x = jax.random.normal(key, (2, 4, 16, 16), dtype=jnp.float32)
    out = jax.block_until_ready(
        median_pool2d(x, kernel_size=3, stride=1, padding=0, same=True))
    ref = _median_pool2d_ref(x, kernel_size=3, stride=1, padding=0, same=True)
    assert out.shape == ref.shape == (2, 4, 16, 16)
    assert jnp.allclose(out, ref, atol=1e-6, rtol=1e-6)

    # Same input, but force tiny blocks to exercise the row-tiling (halo) path
    # and a multi-step grid.
    out_h = jax.block_until_ready(
        median_pool2d(x, kernel_size=3, stride=1, padding=0, same=True,
                      block_bytes=4096))
    assert jnp.allclose(out_h, ref, atol=1e-6, rtol=1e-6)

    # Stride-2 + explicit padding path (wrapper stride subsample, odd sizes).
    x2 = jax.random.normal(jax.random.PRNGKey(1), (1, 3, 13, 11), dtype=jnp.float32)
    out2 = jax.block_until_ready(median_pool2d(x2, kernel_size=3, stride=2, padding=1))
    ref2 = _median_pool2d_ref(x2, kernel_size=3, stride=2, padding=1)
    assert out2.shape == ref2.shape
    assert jnp.allclose(out2, ref2, atol=1e-6, rtol=1e-6)

    # Non-3x3 kernel exercises the Batcher sorting-network fallback.
    x3 = jax.random.normal(jax.random.PRNGKey(2), (1, 2, 12, 12), dtype=jnp.float32)
    out3 = jax.block_until_ready(
        median_pool2d(x3, kernel_size=5, stride=1, padding=0, same=True))
    ref3 = _median_pool2d_ref(x3, kernel_size=5, stride=1, padding=0, same=True)
    assert out3.shape == ref3.shape
    assert jnp.allclose(out3, ref3, atol=1e-6, rtol=1e-6)

    print("KERNEL_OK")
</pallas_src>

<mosaic_0001>
module attributes {stable_mosaic.version = 11 : i64} {
  func.func @_median3x3_kernel(%arg0: i32, %arg1: memref<1x18x128xf32, #tpu.memory_space<vmem>>, %arg2: memref<1x16x128xf32, #tpu.memory_space<vmem>>) attributes {dimension_semantics = [#tpu.dimension_semantics<parallel>], iteration_bounds = array<i64: 2>, scalar_prefetch = 0 : i64, scratch_operands = 0 : i64, tpu.core_type = #tpu.core_type<tc>, window_params = [{transform_indices = @transform_0, window_bounds = array<i64: 1, 18, 128>}, {transform_indices = @transform_1, window_bounds = array<i64: 1, 16, 128>}]} {
    %c0 = arith.constant 0 : index
    %c0_0 = arith.constant 0 : index
    %c0_1 = arith.constant 0 : index
    %0 = vector.load %arg1[%c0, %c0_0, %c0_1] : memref<1x18x128xf32, #tpu.memory_space<vmem>>, vector<1x16x128xf32>
    %c0_2 = arith.constant 0 : index
    %c1 = arith.constant 1 : index
    %c0_3 = arith.constant 0 : index
    %1 = vector.load %arg1[%c0_2, %c1, %c0_3] : memref<1x18x128xf32, #tpu.memory_space<vmem>>, vector<1x16x128xf32>
    %c0_4 = arith.constant 0 : index
    %c2 = arith.constant 2 : index
    %c0_5 = arith.constant 0 : index
    %2 = vector.load %arg1[%c0_4, %c2, %c0_5] : memref<1x18x128xf32, #tpu.memory_space<vmem>>, vector<1x16x128xf32>
    %3 = arith.minimumf %0, %1 : vector<1x16x128xf32>
    %4 = arith.maximumf %0, %1 : vector<1x16x128xf32>
    %5 = arith.minimumf %3, %2 : vector<1x16x128xf32>
    %6 = arith.maximumf %3, %2 : vector<1x16x128xf32>
    %7 = arith.minimumf %6, %4 : vector<1x16x128xf32>
    %8 = arith.maximumf %6, %4 : vector<1x16x128xf32>
    %c127_i32 = arith.constant 127 : i32
    %9 = tpu.dynamic_rotate %5 by %c127_i32 dim 2 : vector<1x16x128xf32>, i32 -> vector<1x16x128xf32>
    %c126_i32 = arith.constant 126 : i32
    %10 = tpu.dynamic_rotate %5 by %c126_i32 dim 2 : vector<1x16x128xf32>, i32 -> vector<1x16x128xf32>
    %c127_i32_6 = arith.constant 127 : i32
    %11 = tpu.dynamic_rotate %7 by %c127_i32_6 dim 2 : vector<1x16x128xf32>, i32 -> vector<1x16x128xf32>
    %c126_i32_7 = arith.constant 126 : i32
    %12 = tpu.dynamic_rotate %7 by %c126_i32_7 dim 2 : vector<1x16x128xf32>, i32 -> vector<1x16x128xf32>
    %c127_i32_8 = arith.constant 127 : i32
    %13 = tpu.dynamic_rotate %8 by %c127_i32_8 dim 2 : vector<1x16x128xf32>, i32 -> vector<1x16x128xf32>
    %c126_i32_9 = arith.constant 126 : i32
    %14 = tpu.dynamic_rotate %8 by %c126_i32_9 dim 2 : vector<1x16x128xf32>, i32 -> vector<1x16x128xf32>
    %15 = arith.maximumf %5, %9 : vector<1x16x128xf32>
    %16 = arith.maximumf %15, %10 : vector<1x16x128xf32>
    %17 = arith.minimumf %8, %13 : vector<1x16x128xf32>
    %18 = arith.minimumf %17, %14 : vector<1x16x128xf32>
    %19 = arith.minimumf %7, %11 : vector<1x16x128xf32>
    %20 = arith.maximumf %7, %11 : vector<1x16x128xf32>
    %21 = arith.minimumf %20, %12 : vector<1x16x128xf32>
    %22 = arith.maximumf %19, %21 : vector<1x16x128xf32>
    %23 = arith.minimumf %16, %22 : vector<1x16x128xf32>
    %24 = arith.maximumf %16, %22 : vector<1x16x128xf32>
    %25 = arith.minimumf %24, %18 : vector<1x16x128xf32>
    %26 = arith.maximumf %23, %25 : vector<1x16x128xf32>
    %c0_10 = arith.constant 0 : index
    %c0_11 = arith.constant 0 : index
    %c0_12 = arith.constant 0 : index
    %27 = vector.load %arg2[%c0_10, %c0_11, %c0_12] : memref<1x16x128xf32, #tpu.memory_space<vmem>>, vector<1x16x128xf32>
    tpu.vector_store %arg2[%c0_10, %c0_11, %c0_12], %26 {strides = array<i32>} : memref<1x16x128xf32, #tpu.memory_space<vmem>>, vector<1x16x128xf32>,
    return
  }
  func.func @transform_0(%arg0: i32) -> (i32, i32, i32) {
    %c0_i32 = arith.constant 0 : i32
    %c0_i32_0 = arith.constant 0 : i32
    %c0_i32_1 = arith.constant 0 : i32
    return %arg0, %c0_i32, %c0_i32_0 : i32, i32, i32
  }
  func.func @transform_1(%arg0: i32) -> (i32, i32, i32) {
    %c0_i32 = arith.constant 0 : i32
    %c0_i32_0 = arith.constant 0 : i32
    %c0_i32_1 = arith.constant 0 : i32
    return %arg0, %c0_i32, %c0_i32_0 : i32, i32, i32
  }
}

</mosaic_0001>

<llo_original>
// kernel: tpu_custom_call.1
$region0: #{tpu_custom_call.1}
  #allocation0 [shape = 'u32[]', space=smem, size = 0x4, offset = 0x4, fixed_abs, tag = 'smem constant byte address 0x4 - core index']
  #allocation1 [shape = 'u32[144,128]{1,0:T(1,128)}', space=vmem, size = 0x12000, scoped, tag = 'internal scratch']
  %s0 = inlined_call_operand.vmem [shape: f32[2,18,128], index: 0, kind: input, shape index: {}]
  %s1 = inlined_call_operand.hbm [shape: f32[2,16,128], index: 1, kind: output, shape index: {}]
  %s2 = sld [smem:[#allocation0]]
  $region37: #{tpu_custom_call.1} parent=0
    _
  %s4 = ssub.s32 1, %s2
  %s5 = scalar_select 0, %s4, %s2
  $region1: #{tpu_custom_call.1} parent=0
    #allocation2 [shape = 'u8[16384]{0}', space=vmem, size = 0x4000, scoped, tag = 'output window, operand 0']
    #allocation3 [shape = 's32[2]{0}', space=sflag, size = 0x8, scoped, tag = 'scoped memory for tpu_custom_call.1']
    %6 = vsyncpa [#allocation3], 0
    %s7 = scalar_lea.sflag [#allocation3], 1
    %8 = vsyncpa %s7, 0
    loop: start=0, step=1, limit=4
    $region2: #{tpu_custom_call.1} parent=1 // loop_pre_header
      _
    $region3: #{tpu_custom_call.1} parent=1 // loop_header
      %s10 = sphi 0, %s14
      %p11 = scmp.ge.s32.totalorder %s10, 4
      %s20 = sphi 0, %s22
      %s23 = sphi 0, %s20
      %s24 = sphi 0, %s23
      %s40 = sphi 0, %s24
      %s46 = sphi 0, %s48
      %s49 = sphi 0, %s46
      %s50 = sphi 0, %s49
      %s66 = sphi 0, %s50
    $region4: #{tpu_custom_call.1} parent=1 // loop_header_branch
      %13 = sbr.rel (%p11) target = $region8
    $region5: #{tpu_custom_call.1} parent=1 // loop_body
      %s15 = ssub.s32 %s10, 1
      %s16 = ssub.s32 %s10, 2
      %s17 = sadd.s32 %s10, 1
      %s18 = ssub.s32 %s10, %s17
      %p19 = scmp.eq.s32.totalorder %s18, 0
      %s21 = sadd.s32 %s20, 1
      %s22 = scalar_select %p19, %s20, %s21
      %p25 = pneg %p19
      %p26 = scmp.eq.s32.totalorder %s10, 1
      %p27 = por %p25, %p26
      %p28 = scmp.ne.s32.totalorder %s20, %s23
      %p29 = scmp.eq.s32.totalorder %s10, 0
      %p30 = por %p28, %p29
      %p31 = scmp.ne.s32.totalorder %s20, %s23
      %p32 = scmp.eq.s32.totalorder %s15, 1
      %p33 = por %p31, %p32
      %p34 = scmp.ne.s32.totalorder %s23, %s24
      %p35 = scmp.eq.s32.totalorder %s15, 0
      %p36 = por %p34, %p35
      %p37 = scmp.ne.s32.totalorder %s23, %s24
      %p38 = scmp.eq.s32.totalorder %s16, 1
      %p39 = por %p37, %p38
      %p41 = scmp.ne.s32.totalorder %s24, %s40
      %p42 = scmp.eq.s32.totalorder %s16, 0
      %p43 = por %p41, %p42
      %s44 = ssub.s32 %s10, %s17
      %p45 = scmp.eq.s32.totalorder %s44, 0
      %s47 = sadd.s32 %s46, 1
      %s48 = scalar_select %p45, %s46, %s47
      %p51 = pneg %p45
      %p52 = scmp.eq.s32.totalorder %s10, 1
      %p53 = por %p51, %p52
      %p54 = scmp.ne.s32.totalorder %s46, %s49
      %p55 = scmp.eq.s32.totalorder %s10, 0
      %p56 = por %p54, %p55
      %p57 = scmp.ne.s32.totalorder %s46, %s49
      %p58 = scmp.eq.s32.totalorder %s15, 1
      %p59 = por %p57, %p58
      %p60 = scmp.ne.s32.totalorder %s49, %s50
      %p61 = scmp.eq.s32.totalorder %s15, 0
      %p62 = por %p60, %p61
      %p63 = scmp.ne.s32.totalorder %s49, %s50
      %p64 = scmp.eq.s32.totalorder %s16, 1
      %p65 = por %p63, %p64
      %p67 = scmp.ne.s32.totalorder %s50, %s66
      %p68 = scmp.eq.s32.totalorder %s16, 0
      %p69 = por %p67, %p68
      %p70 = scmp.le.s32.totalorder 1, %s10
      %p71 = scmp.lt.s32.totalorder %s10, 3
      %p72 = pnand %p70, %p71
      %p73 = pneg %p72
      // Predicated region
      $region9: #{tpu_custom_call.1} parent=5 // pred_check
        _
      $region10: #{tpu_custom_call.1} parent=5 // pred_check_branch
        %75 = sbr.rel (%p72) target = $region12
      $region11: #{tpu_custom_call.1} parent=5 // pred_region
        %s76 = ssub.s32 %s10, 1
      $region12: #{tpu_custom_call.1} parent=5 // pred_fallthru
        _
      %p77 = scmp.lt.s32.totalorder %s10, 2
      // Predicated region
      $region13: #{tpu_custom_call.1} parent=5 // pred_check
        %p78 = pneg %p77
      $region14: #{tpu_custom_call.1} parent=5 // pred_check_branch
        %80 = sbr.rel (%p78) target = $region16
      $region15: #{tpu_custom_call.1} parent=5 // pred_region
        // Predicated region
        $region17: #{tpu_custom_call.1} parent=15 // pred_check
          %p81 = pneg %p30
        $region18: #{tpu_custom_call.1} parent=15 // pred_check_branch
          %83 = sbr.rel (%p81) target = $region20
        $region19: #{tpu_custom_call.1} parent=15 // pred_region
          %p84 = scmp.lt.s32.totalorder %s10, 1
          %s85 = scalar_select %p84, %s10, 1
          %s86 = smul.addr %s85, 3
          %s87 = smul.addr %s86, 8
          %s88 = scalar_lea.vmem %s0, %s87
        $region20: #{tpu_custom_call.1} parent=15 // pred_fallthru
          _
      $region16: #{tpu_custom_call.1} parent=5 // pred_fallthru
        _
      %p89 = scmp.le.s32.totalorder 1, %s10
      %p90 = scmp.lt.s32.totalorder %s10, 3
      %p91 = pnand %p89, %p90
      %p92 = pneg %p91
      // Predicated region
      $region21: #{tpu_custom_call.1} parent=5 // pred_check
        _
      $region22: #{tpu_custom_call.1} parent=5 // pred_check_branch
        %94 = sbr.rel (%p91) target = $region24
      $region23: #{tpu_custom_call.1} parent=5 // pred_region
        %s95 = ssub.s32 %s10, 1
        %p96 = scmp.lt.s32.totalorder %s15, 1
        %s97 = scalar_select %p96, %s15, 1
        %s98 = smul.addr %s97, 3
        %s99 = smul.addr %s98, 8
        %s100 = scalar_lea.vmem %s0, %s99
        %p101 = pneg %p36
        %p102 = pneg %p33
        %p103 = pneg %p62
        %p104 = pneg %p59
        %s105 = sand.u32 %s49, 1
        %s106 = scalar_lea.sflag [#allocation3], %s105
        %s107 = sand.u32 %s49, 1
        %s108 = smul.addr %s107, 16
        %s109 = scalar_lea.vmem [#allocation2], %s108
        %p110 = scmp.lt.s32.totalorder %s15, 1
        %s111 = scalar_select %p110, %s15, 1
        %s112 = smul.addr %s111, 3
        %s113 = smul.addr %s112, 8
        %s114 = scalar_lea.vmem %s0, %s113
        %v115 = vld [vmem:[%s114] sm:$0xff]
        %v116 = vld [vmem:[%s114 + $0x8] sm:$0xff]
        %v117 = vld [vmem:[%s114 + $0x1] sm:$0xff]
        %v118 = vld [vmem:[%s114 + $0x9] sm:$0xff]
        %v119 = vld [vmem:[%s114 + $0x2] sm:$0xff]
        %v120 = vld [vmem:[%s114 + $0xa] sm:$0xff]
        %v121 = vmin.f32 %v115, %v117
        %v122 = vmin.f32 %v116, %v118
        %v123 = vmax.f32 %v115, %v117
        %v124 = vmax.f32 %v116, %v118
        %v125 = vmin.f32 %v121, %v119
        %v126 = vmin.f32 %v122, %v120
        %v127 = vmax.f32 %v121, %v119
        %v128 = vmax.f32 %v122, %v120
        %v129 = vmin.f32 %v127, %v123
        %v130 = vmin.f32 %v128, %v124
        %v131 = vmax.f32 %v127, %v123
        %v132 = vmax.f32 %v128, %v124
        %133 = vrot.lane.b32.xlu0 %v125, 127
        %v134 = vpop.permute.xlu0 %133
        %135 = vrot.lane.b32.xlu0 %v126, 127
        %v136 = vpop.permute.xlu0 %135
        %137 = vrot.lane.b32.xlu0 %v125, 126
        %v138 = vpop.permute.xlu0 %137
        %139 = vrot.lane.b32.xlu0 %v126, 126
        %v140 = vpop.permute.xlu0 %139
        %141 = vrot.lane.b32.xlu0 %v129, 127
        %v142 = vpop.permute.xlu0 %141
        %143 = vrot.lane.b32.xlu0 %v130, 127
        %v144 = vpop.permute.xlu0 %143
        %145 = vrot.lane.b32.xlu0 %v129, 126
        %v146 = vpop.permute.xlu0 %145
        %147 = vrot.lane.b32.xlu0 %v130, 126
        %v148 = vpop.permute.xlu0 %147
        %149 = vrot.lane.b32.xlu0 %v131, 127
        %v150 = vpop.permute.xlu0 %149
        %151 = vrot.lane.b32.xlu0 %v132, 127
        %v152 = vpop.permute.xlu0 %151
        %153 = vrot.lane.b32.xlu0 %v131, 126
        %v154 = vpop.permute.xlu0 %153
        %155 = vrot.lane.b32.xlu0 %v132, 126
        %v156 = vpop.permute.xlu0 %155
        %v157 = vmax.f32 %v125, %v134
        %v158 = vmax.f32 %v126, %v136
        %v159 = vmax.f32 %v157, %v138
        %v160 = vmax.f32 %v158, %v140
        %v161 = vmin.f32 %v131, %v150
        %v162 = vmin.f32 %v132, %v152
        %v163 = vmin.f32 %v161, %v154
        %v164 = vmin.f32 %v162, %v156
        %v165 = vmin.f32 %v129, %v142
        %v166 = vmin.f32 %v130, %v144
        %v167 = vmax.f32 %v129, %v142
        %v168 = vmax.f32 %v130, %v144
        %v169 = vmin.f32 %v167, %v146
        %v170 = vmin.f32 %v168, %v148
        %v171 = vmax.f32 %v165, %v169
        %v172 = vmax.f32 %v166, %v170
        %v173 = vmin.f32 %v159, %v171
        %v174 = vmin.f32 %v160, %v172
        %v175 = vmax.f32 %v159, %v171
        %v176 = vmax.f32 %v160, %v172
        %v177 = vmin.f32 %v175, %v163
        %v178 = vmin.f32 %v176, %v164
        %v179 = vmax.f32 %v173, %v177
        %v180 = vmax.f32 %v174, %v178
        %181 = vst [vmem:[%s109] sm:$0xff] %v179
        %182 = vst [vmem:[%s109 + $0x8] sm:$0xff] %v180
        %s183 = sand.u32 %s49, 1
        %s184 = scalar_lea.sflag [#allocation3], %s183
        %s185 = sand.u32 %s49, 1
        %s186 = smul.addr %s185, 16
        %s187 = scalar_lea.vmem [#allocation2], %s186
        // Predicated region
        $region25: #{tpu_custom_call.1} parent=23 // pred_check
          %p188 = pneg %p59
        $region26: #{tpu_custom_call.1} parent=23 // pred_check_branch
          %190 = sbr.rel (%p188) target = $region28
        $region27: #{tpu_custom_call.1} parent=23 // pred_region
          %s192 = ssub.s32 256, 256
          %193 = vsyncadd %s184, %s192
          %s194 = smul.addr %s15, 2
          %s195 = smul.addr %s194, 128
          %s196 = scalar_lea.hbm %s1, %s195
          %s197 = sshll.u32 %s187, 4
          %s198 = int_to_ptr.vmem [resolvable:$true] %s197
          %203 = dma.vmem_to_hbm [thread:$0]  %s198, 256, %s196, %s184, 128, 128, 8
        $region28: #{tpu_custom_call.1} parent=23 // pred_fallthru
          _
      $region24: #{tpu_custom_call.1} parent=5 // pred_fallthru
        _
      %p204 = scmp.le.s32.totalorder 2, %s10
      // Predicated region
      $region29: #{tpu_custom_call.1} parent=5 // pred_check
        %p205 = pneg %p204
      $region30: #{tpu_custom_call.1} parent=5 // pred_check_branch
        %207 = sbr.rel (%p205) target = $region32
      $region31: #{tpu_custom_call.1} parent=5 // pred_region
        %s208 = ssub.s32 %s10, 2
        // Predicated region
        $region33: #{tpu_custom_call.1} parent=31 // pred_check
          %p209 = pneg %p65
        $region34: #{tpu_custom_call.1} parent=31 // pred_check_branch
          %211 = sbr.rel (%p209) target = $region36
        $region35: #{tpu_custom_call.1} parent=31 // pred_region
          %s212 = sand.u32 %s50, 1
          %s213 = scalar_lea.sflag [#allocation3], %s212
          %s214 = sand.u32 %s50, 1
          %s215 = smul.addr %s214, 16
          %s216 = scalar_lea.vmem [#allocation2], %s215
          %217 = dma.done %s213, 256
        $region36: #{tpu_custom_call.1} parent=31 // pred_fallthru
          _
      $region32: #{tpu_custom_call.1} parent=5 // pred_fallthru
        _
    $region6: #{tpu_custom_call.1} parent=1 // loop_footer
      %s14 = sadd.s32 1, %s10
    $region7: #{tpu_custom_call.1} parent=1 // loop_footer_branch
      %9 = sbr.rel target = $region3
    $region8: #{tpu_custom_call.1} parent=1 // loop_exit
      _
    %218 = vsyncpa [#allocation3], 1
    %s219 = scalar_lea.sflag [#allocation3], 1
    %220 = vsyncpa %s219, 1

</llo_original>
